<compile_context>
chip_gen: v5e
topology: v5e:2x2
jax: 0.10.0
libtpu: 0.0.40
codegen_flags: <defaults>
</compile_context>

<pallas_src>
import jax
import jax.numpy as jnp
from jax.experimental import pallas as pl
from jax.experimental.pallas import tpu as pltpu

BLOCK_SIZE = 8
_BLOCK_BYTES_TARGET = 4 * 1024 * 1024  # ~4 MiB per block; 4x double-buffered ~16 MiB


def _grid_crop_kernel(x_ref, m_ref, o_ref):
    # x_ref: (TR, TW) tile of the flattened encoded image
    # m_ref: (1, TW) int8 mask tile (nonzero => pixel belongs to a switched-on block)
    x = x_ref[...]
    m = m_ref[...]
    neg_one = jnp.asarray(-1.0, dtype=x.dtype)
    o_ref[...] = jnp.where(m != 0, neg_one, x)


def _largest_divisor(total, limit, multiple):
    """Largest divisor of `total` that is <= limit and a multiple of `multiple`."""
    best = None
    d = multiple
    hi = min(limit, total)
    while d <= hi:
        if total % d == 0:
            best = d
        d += multiple
    return best


def _pick_tiles(rows, cols, itemsize):
    budget_elems = max(8 * 128, _BLOCK_BYTES_TARGET // itemsize)
    # Column (lane) tile: full extent if it fits, else a multiple-of-128 divisor.
    if cols <= budget_elems:
        tw = cols
    else:
        tw = _largest_divisor(cols, budget_elems, 128) or cols
    # Row (sublane) tile: full extent if it fits, else a multiple-of-8 divisor.
    row_budget = max(1, budget_elems // tw)
    if rows <= row_budget:
        tr = rows
    else:
        tr = _largest_divisor(rows, row_budget, 8) or rows
    return tr, tw


def grid_crop_forward(noised_and_cover, rate, key):
    """Mirrors grid_crop.forward: returns [cropped_encoded, cover]."""
    encoded_image, cover_image = noised_and_cover
    N, C, H, W = encoded_image.shape
    assert H % BLOCK_SIZE == 0 and W % BLOCK_SIZE == 0

    # block_switch = uniform(0,1, [H//8, W//8]) < rate   (True => block set to -1)
    # TODO(synk): original module draws this with host-side np.random each call;
    # here the randomness comes from an explicit JAX key argument.
    block_switch = (
        jax.random.uniform(key, (H // BLOCK_SIZE, W // BLOCK_SIZE), dtype=jnp.float32)
        < rate
    )
    # Expand to a per-pixel mask, but ship it compactly: int8, flattened to the
    # same (H*W) pixel order as the lane-dense image slab.
    mask_flat = (
        jnp.repeat(jnp.repeat(block_switch, BLOCK_SIZE, axis=0), BLOCK_SIZE, axis=1)
        .astype(jnp.int8)
        .reshape(1, H * W)
    )

    rows, cols = N * C, H * W
    x2 = encoded_image.reshape(rows, cols)  # lane-dense slab (contiguous reshape)

    itemsize = jnp.dtype(encoded_image.dtype).itemsize
    tr, tw = _pick_tiles(rows, cols, itemsize)
    grid = (rows // tr, cols // tw)

    cropped2 = pl.pallas_call(
        _grid_crop_kernel,
        out_shape=jax.ShapeDtypeStruct((rows, cols), encoded_image.dtype),
        grid=grid,
        in_specs=[
            pl.BlockSpec((tr, tw), lambda i, j: (i, j)),
            pl.BlockSpec((1, tw), lambda i, j: (0, j)),
        ],
        out_specs=pl.BlockSpec((tr, tw), lambda i, j: (i, j)),
        compiler_params=pltpu.CompilerParams(
            dimension_semantics=("parallel", "parallel"),
            vmem_limit_bytes=32 * 1024 * 1024,
        ),
    )(x2, mask_flat)

    cropped = cropped2.reshape(N, C, H, W)
    # Cover image passes through unchanged (the module just clones it).
    return [cropped, cover_image]


if __name__ == "__main__":
    key = jax.random.PRNGKey(0)
    k_enc, k_cov, k_switch = jax.random.split(key, 3)

    N, C, H, W = 2, 4, 16, 16
    rate = 0.5

    encoded = jax.random.normal(k_enc, (N, C, H, W), dtype=jnp.float32)
    cover = jax.random.normal(k_cov, (N, C, H, W), dtype=jnp.float32)

    out = grid_crop_forward([encoded, cover], rate, k_switch)
    out = [jax.block_until_ready(o) for o in out]

    # Reference check in plain JAX.
    block_switch = (
        jax.random.uniform(
            k_switch, (H // BLOCK_SIZE, W // BLOCK_SIZE), dtype=jnp.float32
        )
        < rate
    )
    mask_hw = jnp.repeat(jnp.repeat(block_switch, BLOCK_SIZE, 0), BLOCK_SIZE, 1)
    ref = jnp.where(mask_hw[None, None, :, :], jnp.float32(-1.0), encoded)
    assert jnp.allclose(out[0], ref), "encoded image mismatch"
    assert jnp.allclose(out[1], cover), "cover image mismatch"

    print("KERNEL_OK")
</pallas_src>

<mosaic_0001>
module attributes {stable_mosaic.version = 11 : i64} {
  func.func @_grid_crop_kernel(%arg0: i32, %arg1: i32, %arg2: memref<8x256xf32, #tpu.memory_space<vmem>>, %arg3: memref<1x256xi8, #tpu.memory_space<vmem>>, %arg4: memref<8x256xf32, #tpu.memory_space<vmem>>) attributes {dimension_semantics = [#tpu.dimension_semantics<parallel>, #tpu.dimension_semantics<parallel>], iteration_bounds = array<i64: 1, 1>, scalar_prefetch = 0 : i64, scratch_operands = 0 : i64, tpu.core_type = #tpu.core_type<tc>, window_params = [{transform_indices = @transform_0, window_bounds = array<i64: 8, 256>}, {transform_indices = @transform_1, window_bounds = array<i64: 1, 256>}, {transform_indices = @transform_2, window_bounds = array<i64: 8, 256>}]} {
    %c0 = arith.constant 0 : index
    %c0_0 = arith.constant 0 : index
    %0 = vector.load %arg2[%c0, %c0_0] : memref<8x256xf32, #tpu.memory_space<vmem>>, vector<8x256xf32>
    %c0_1 = arith.constant 0 : index
    %c0_2 = arith.constant 0 : index
    %1 = vector.load %arg3[%c0_1, %c0_2] : memref<1x256xi8, #tpu.memory_space<vmem>>, vector<1x256xi8>
    %c0_i8 = arith.constant 0 : i8
    %2 = vector.broadcast %c0_i8 : i8 to vector<1x256xi8>
    %3 = arith.cmpi ne, %1, %2 : vector<1x256xi8>
    %cst = arith.constant -1.000000e+00 : f32
    %4 = vector.shape_cast %3 : vector<1x256xi1> to vector<1x256xi1>
    %5 = vector.broadcast %4 : vector<1x256xi1> to vector<8x256xi1>
    %6 = vector.broadcast %cst : f32 to vector<8x256xf32>
    %7 = arith.select %5, %6, %0 : vector<8x256xi1>, vector<8x256xf32>
    %c0_3 = arith.constant 0 : index
    %c0_4 = arith.constant 0 : index
    %8 = vector.load %arg4[%c0_3, %c0_4] : memref<8x256xf32, #tpu.memory_space<vmem>>, vector<8x256xf32>
    tpu.vector_store %arg4[%c0_3, %c0_4], %7 {strides = array<i32>} : memref<8x256xf32, #tpu.memory_space<vmem>>, vector<8x256xf32>,
    return
  }
  func.func @transform_0(%arg0: i32, %arg1: i32) -> (i32, i32) {
    %c0_i32 = arith.constant 0 : i32
    return %arg0, %arg1 : i32, i32
  }
  func.func @transform_1(%arg0: i32, %arg1: i32) -> (i32, i32) {
    %c0_i32 = arith.constant 0 : i32
    %c0_i32_0 = arith.constant 0 : i32
    return %c0_i32, %arg1 : i32, i32
  }
  func.func @transform_2(%arg0: i32, %arg1: i32) -> (i32, i32) {
    %c0_i32 = arith.constant 0 : i32
    return %arg0, %arg1 : i32, i32
  }
}

</mosaic_0001>

<llo_original>
// kernel: tpu_custom_call.1
$region0: #{tpu_custom_call.1}
  #allocation0 [shape = 'u32[]', space=smem, size = 0x4, offset = 0x4, fixed_abs, tag = 'smem constant byte address 0x4 - core index']
  #allocation1 [shape = 'u32[72,128]{1,0:T(1,128)}', space=vmem, size = 0x9000, scoped, tag = 'internal scratch']
  %s0 = inlined_call_operand.hbm [shape: f32[8,256], index: 0, kind: input, shape index: {}]
  %s1 = inlined_call_operand.hbm [shape: s8[1,256], index: 1, kind: input, shape index: {}]
  %s2 = inlined_call_operand.hbm [shape: f32[8,256], index: 2, kind: output, shape index: {}]
  %s3 = sld [smem:[#allocation0]]
  $region26: #{tpu_custom_call.1} parent=0
    _
  %s5 = ssub.s32 1, %s3
  %s6 = scalar_select 0, %s5, %s3
  $region1: #{tpu_custom_call.1} parent=0
    #allocation2 [shape = 'u8[8192]{0}', space=vmem, size = 0x2000, scoped, tag = 'input window, operand 0, single buffered']
    #allocation3 [shape = 's32[1]{0}', space=sflag, size = 0x4, scoped, tag = 'scoped memory for tpu_custom_call.1']
    #allocation4 [shape = 's32[1]{0}', space=sflag, size = 0x4, scoped, tag = 'scoped memory for tpu_custom_call.1']
    #allocation5 [shape = 'u8[1024]{0}', space=vmem, size = 0x400, scoped, tag = 'input window, operand 1, single buffered']
    #allocation6 [shape = 's32[1]{0}', space=sflag, size = 0x4, scoped, tag = 'scoped memory for tpu_custom_call.1']
    #allocation7 [shape = 'u8[8192]{0}', space=vmem, size = 0x2000, scoped, tag = 'output window, operand 0, single buffered']
    %7 = vsyncpa [#allocation3], 0
    %8 = vsyncpa [#allocation6], 0
    %9 = vsyncpa [#allocation4], 0
    // Predicated region
    $region2: #{tpu_custom_call.1} parent=1 // pred_check
      _
    $region3: #{tpu_custom_call.1} parent=1 // pred_check_branch
      %11 = sbr.rel (0) target = $region5
    $region4: #{tpu_custom_call.1} parent=1 // pred_region
      %13 = vsyncadd [#allocation3], 0
      %s15 = sshll.u32 %s0, 4
      %s16 = int_to_ptr.hbm [resolvable:$true] %s15
      %s17 = sshll.u32 [#allocation2], 4
      %s18 = int_to_ptr.vmem [resolvable:$true] %s17
      %20 = dma.hbm_to_vmem [thread:$0]  %s16, 256, %s18, [#allocation3]
    $region5: #{tpu_custom_call.1} parent=1 // pred_fallthru
      _
    // Predicated region
    $region6: #{tpu_custom_call.1} parent=1 // pred_check
      _
    $region7: #{tpu_custom_call.1} parent=1 // pred_check_branch
      %22 = sbr.rel (0) target = $region9
    $region8: #{tpu_custom_call.1} parent=1 // pred_region
      %24 = vsyncadd [#allocation6], 0
      %s26 = sshll.u32 %s1, 4
      %s27 = int_to_ptr.hbm [resolvable:$true] %s26
      %s28 = sshll.u32 [#allocation5], 4
      %s29 = int_to_ptr.vmem [resolvable:$true] %s28
      %31 = dma.hbm_to_vmem [thread:$0]  %s27, 32, %s29, [#allocation6]
    $region9: #{tpu_custom_call.1} parent=1 // pred_fallthru
      _
    // Predicated region
    $region10: #{tpu_custom_call.1} parent=1 // pred_check
      _
    $region11: #{tpu_custom_call.1} parent=1 // pred_check_branch
      %33 = sbr.rel (0) target = $region13
    $region12: #{tpu_custom_call.1} parent=1 // pred_region
      %35 = dma.done [#allocation3], 256
    $region13: #{tpu_custom_call.1} parent=1 // pred_fallthru
      _
    // Predicated region
    $region14: #{tpu_custom_call.1} parent=1 // pred_check
      _
    $region15: #{tpu_custom_call.1} parent=1 // pred_check_branch
      %37 = sbr.rel (0) target = $region17
    $region16: #{tpu_custom_call.1} parent=1 // pred_region
      %39 = dma.done [#allocation6], 32
    $region17: #{tpu_custom_call.1} parent=1 // pred_fallthru
      _
    %v42 = vld [vmem:[#allocation2] sm:$0xff]
    %v43 = vld [vmem:[#allocation2 + $0x8] sm:$0xff]
    %v44 = vld [vmem:[#allocation5] sm:$0x3]
    %vm45 = vnez %v44
    %v46 = vsel %vm45, 16843009, 0
    %v47 = vunpack.c.0.s8 %v46
    %vm48 = vcmp.ne.s32.totalorder %v47, 0
    %v49 = vsel %vm48, 1, 0
    %v50 = vperm.slane %v49, 0
    %v51 = vperm.slane %v49, 4
    %vm52 = vcmp.ne.s32.totalorder %v50, 0
    %vm53 = vcmp.ne.s32.totalorder %v51, 0
    %v54 = vsel %vm52, 1, 0
    %v55 = vsel %vm53, 1, 0
    %v56 = vperm.slane %v54, 0
    %v57 = vperm.slane %v55, 0
    %vm58 = vcmp.eq.s32.totalorder %v56, 1
    %vm59 = vcmp.eq.s32.totalorder %v57, 1
    %v60 = vsel %vm58, -1.0, %v42
    %v61 = vsel %vm59, -1.0, %v43
    %62 = vst [vmem:[#allocation7] sm:$0xff] %v60
    %63 = vst [vmem:[#allocation7 + $0x8] sm:$0xff] %v61
    // Predicated region
    $region18: #{tpu_custom_call.1} parent=1 // pred_check
      _
    $region19: #{tpu_custom_call.1} parent=1 // pred_check_branch
      %65 = sbr.rel (0) target = $region21
    $region20: #{tpu_custom_call.1} parent=1 // pred_region
      %67 = vsyncadd [#allocation4], 0
      %s69 = sshll.u32 [#allocation7], 4
      %s70 = int_to_ptr.vmem [resolvable:$true] %s69
      %s71 = sshll.u32 %s2, 4
      %s72 = int_to_ptr.hbm [resolvable:$true] %s71
      %74 = dma.vmem_to_hbm [thread:$0]  %s70, 256, %s72, [#allocation4]
    $region21: #{tpu_custom_call.1} parent=1 // pred_fallthru
      _
    // Predicated region
    $region22: #{tpu_custom_call.1} parent=1 // pred_check
      _
    $region23: #{tpu_custom_call.1} parent=1 // pred_check_branch
      %76 = sbr.rel (0) target = $region25
    $region24: #{tpu_custom_call.1} parent=1 // pred_region
      %78 = dma.done [#allocation4], 256
    $region25: #{tpu_custom_call.1} parent=1 // pred_fallthru
      _
    %79 = vsyncpa [#allocation3], 1
    %80 = vsyncpa [#allocation6], 1
    %81 = vsyncpa [#allocation4], 1

</llo_original>
